<compile_context>
chip_gen: v5e
topology: v5e:2x2
jax: 0.10.0
libtpu: 0.0.40
codegen_flags: <defaults>
</compile_context>

<pallas_src>
import functools

import jax
import jax.numpy as jnp
from jax.experimental import pallas as pl
from jax.experimental.pallas import tpu as pltpu


def _round_up(x, m):
    return ((x + m - 1) // m) * m


def _disc_kernel(u_ref, b_ref, hpl_ref, hmi_ref, out_ref):
    # u_ref   : (1, n_h)        VMEM (resident across grid steps)
    # b_ref   : (1,)   f32      SMEM (scalar bias)
    # hpl_ref : (TILE_N, n_h)   VMEM (streamed tile of positive embeddings)
    # hmi_ref : (TILE_N, n_h)   VMEM (streamed tile of negative embeddings)
    # out_ref : (2, TILE_N) f32 VMEM (lane-dense scores: row 0 = sc1, row 1 = sc2)
    u = u_ref[...]
    b = b_ref[0]
    # Contract the feature axis of both operands on the MXU (trans_b form,
    # no explicit transpose op): (1, n_h) x (TILE_N, n_h) -> (1, TILE_N).
    dims = (((1,), (1,)), ((), ()))
    sc1 = jax.lax.dot_general(u, hpl_ref[...], dims,
                              preferred_element_type=jnp.float32)
    sc2 = jax.lax.dot_general(u, hmi_ref[...], dims,
                              preferred_element_type=jnp.float32)
    # Single unmasked, lane-dense store of the whole (2, TILE_N) tile;
    # bias added once per tile.
    out_ref[...] = jnp.concatenate([sc1, sc2], axis=0) + b


def discriminator_forward(c, h_pl, h_mi, weight, bias,
                          s_bias1=None, s_bias2=None,
                          *, stream_dtype=jnp.float32, tile_n=512):
    """Discriminator forward.

    c:      (1, n_h)   summary vector
    h_pl:   (N, n_h)   positive node embeddings
    h_mi:   (N, n_h)   negative node embeddings
    weight: (n_h, n_h) squeezed Bilinear weight (out_features == 1)
    bias:   (1,)       Bilinear bias
    Returns logits of shape (N, 2), matching torch.cat((sc_1, sc_2), 1).
    """
    n, n_h = h_pl.shape

    # u[i] = sum_j W[i, j] * c[j]  (== c @ W.T), computed once in f32.
    u = (c.astype(jnp.float32).reshape(1, n_h)
         @ weight.astype(jnp.float32).T).astype(stream_dtype)

    hp = h_pl.astype(stream_dtype)
    hm = h_mi.astype(stream_dtype)
    b = jnp.asarray(bias, jnp.float32).reshape(1)

    # Tile selection: single tile when N is small, otherwise 128-aligned tiles
    # so the lane-dense (2, TILE_N) output blocks satisfy the (8, 128) rule.
    if n <= tile_n:
        tn = max(8, _round_up(n, 8))
        n_pad = tn
    else:
        tn = max(128, (tile_n // 128) * 128)
        n_pad = _round_up(n, tn)

    if n_pad != n:
        pad = n_pad - n
        hp = jnp.pad(hp, ((0, pad), (0, 0)))
        hm = jnp.pad(hm, ((0, pad), (0, 0)))

    grid = (n_pad // tn,)

    itemsize = jnp.dtype(stream_dtype).itemsize
    cost = pl.CostEstimate(
        flops=4 * n_pad * n_h,                       # two (1,n_h)x(n_h,TILE_N) dots per row
        transcendentals=0,
        bytes_accessed=2 * n_pad * n_h * itemsize    # h_pl + h_mi streams
        + n_h * itemsize                             # u
        + 2 * n_pad * 4,                             # output
    )

    # TODO(synk): when n_h < 128 the lanes are under-occupied; a wrapper-side
    # repack (N, n_h) -> (N / (128 // n_h), 128) would restore full lane density.
    scores = pl.pallas_call(
        _disc_kernel,
        out_shape=jax.ShapeDtypeStruct((2, n_pad), jnp.float32),
        grid=grid,
        in_specs=[
            pl.BlockSpec((1, n_h), lambda i: (0, 0)),                 # u (resident)
            pl.BlockSpec(memory_space=pltpu.MemorySpace.SMEM),        # bias
            pl.BlockSpec((tn, n_h), lambda i: (i, 0)),                # h_pl tile
            pl.BlockSpec((tn, n_h), lambda i: (i, 0)),                # h_mi tile
        ],
        out_specs=pl.BlockSpec((2, tn), lambda i: (0, i)),            # lane-dense
        compiler_params=pltpu.CompilerParams(
            dimension_semantics=("parallel",),
            vmem_limit_bytes=32 * 1024 * 1024,
        ),
        cost_estimate=cost,
    )(u, b, hp, hm)

    logits = scores[:, :n].T  # (N, 2)

    # Optional additive biases (glue, matching the PyTorch `+=` on sc_1/sc_2).
    if s_bias1 is not None:
        logits = logits.at[:, 0:1].add(
            jnp.reshape(s_bias1, (n, 1)).astype(jnp.float32))
    if s_bias2 is not None:
        logits = logits.at[:, 1:2].add(
            jnp.reshape(s_bias2, (n, 1)).astype(jnp.float32))
    return logits


def init_discriminator_params(key, n_h):
    """Deterministic init mirroring xavier_normal_ on Bilinear weight (1, n_h, n_h)."""
    fan_in = n_h * n_h
    fan_out = 1 * n_h
    std = (2.0 / (fan_in + fan_out)) ** 0.5
    w = jax.random.normal(key, (n_h, n_h), dtype=jnp.float32) * std
    b = jnp.zeros((1,), dtype=jnp.float32)  # bias.fill_(0.0)
    return w, b


def _reference(c, h_pl, h_mi, weight, bias):
    cx = jnp.broadcast_to(c, h_pl.shape)
    v = cx @ weight.T
    return jnp.concatenate(
        [jnp.sum(h_pl * v, axis=-1, keepdims=True) + bias[0],
         jnp.sum(h_mi * v, axis=-1, keepdims=True) + bias[0]],
        axis=1,
    )


if __name__ == "__main__":
    key = jax.random.PRNGKey(0)

    # --- Test 1: small shapes matching the module defaults (single tile). ---
    n_h, N = 32, 8
    k_w, k_c, k_pl, k_mi = jax.random.split(key, 4)
    weight, bias = init_discriminator_params(k_w, n_h)
    c = jax.random.normal(k_c, (1, n_h), dtype=jnp.float32)
    h_pl = jax.random.normal(k_pl, (N, n_h), dtype=jnp.float32)
    h_mi = jax.random.normal(k_mi, (N, n_h), dtype=jnp.float32)

    logits = jax.block_until_ready(
        discriminator_forward(c, h_pl, h_mi, weight, bias))
    ref = _reference(c, h_pl, h_mi, weight, bias)
    assert logits.shape == (N, 2)
    assert jnp.allclose(logits, ref, atol=1e-4, rtol=1e-4)

    # --- Test 2: exercise the grid path (multiple tiles + padding). ---
    n_h2, N2 = 64, 300
    k_w2, k_c2, k_pl2, k_mi2 = jax.random.split(jax.random.PRNGKey(1), 4)
    weight2, bias2 = init_discriminator_params(k_w2, n_h2)
    c2 = jax.random.normal(k_c2, (1, n_h2), dtype=jnp.float32)
    h_pl2 = jax.random.normal(k_pl2, (N2, n_h2), dtype=jnp.float32)
    h_mi2 = jax.random.normal(k_mi2, (N2, n_h2), dtype=jnp.float32)

    logits2 = jax.block_until_ready(
        discriminator_forward(c2, h_pl2, h_mi2, weight2, bias2, tile_n=128))
    ref2 = _reference(c2, h_pl2, h_mi2, weight2, bias2)
    assert logits2.shape == (N2, 2)
    assert jnp.allclose(logits2, ref2, atol=1e-4, rtol=1e-4)

    # --- Test 3: bf16 streaming (memory-bound fast path), f32 accumulation. ---
    logits_bf16 = jax.block_until_ready(
        discriminator_forward(c2, h_pl2, h_mi2, weight2, bias2,
                              stream_dtype=jnp.bfloat16, tile_n=128))
    assert logits_bf16.shape == (N2, 2)
    assert jnp.allclose(logits_bf16, ref2, atol=5e-2, rtol=5e-2)

    print("KERNEL_OK")
</pallas_src>

<mosaic_0001>
module attributes {stable_mosaic.version = 11 : i64} {
  func.func @_disc_kernel(%arg0: i32, %arg1: memref<1x32xf32, #tpu.memory_space<vmem>>, %arg2: memref<1xf32, #tpu.memory_space<smem>>, %arg3: memref<8x32xf32, #tpu.memory_space<vmem>>, %arg4: memref<8x32xf32, #tpu.memory_space<vmem>>, %arg5: memref<2x8xf32, #tpu.memory_space<vmem>>) attributes {dimension_semantics = [#tpu.dimension_semantics<parallel>], iteration_bounds = array<i64: 1>, scalar_prefetch = 0 : i64, scratch_operands = 0 : i64, tpu.core_type = #tpu.core_type<tc>, window_params = [{pipeline_mode = #tpu.pipeline_mode<synchronous>, transform_indices = @transform_0, window_bounds = array<i64: 1, 32>}, {transform_indices = @transform_1, window_bounds = array<i64: 1>}, {transform_indices = @transform_2, window_bounds = array<i64: 8, 32>}, {transform_indices = @transform_3, window_bounds = array<i64: 8, 32>}, {transform_indices = @transform_4, window_bounds = array<i64: 2, 8>}]} {
    %c0 = arith.constant 0 : index
    %c0_0 = arith.constant 0 : index
    %0 = vector.load %arg1[%c0, %c0_0] : memref<1x32xf32, #tpu.memory_space<vmem>>, vector<1x32xf32>
    %c0_1 = arith.constant 0 : index
    %1 = memref.load %arg2[%c0_1] : memref<1xf32, #tpu.memory_space<smem>>
    %c0_2 = arith.constant 0 : index
    %c0_3 = arith.constant 0 : index
    %2 = vector.load %arg3[%c0_2, %c0_3] : memref<8x32xf32, #tpu.memory_space<vmem>>, vector<8x32xf32>
    %cst = arith.constant dense<0.000000e+00> : vector<1x8xf32>
    %3 = tpu.matmul %0, %2, %cst {dimension_numbers = #tpu.dot_dimension_numbers<[1], [1], [0], [0], [0, 0, 1, 0], [], []>} : vector<1x32xf32>, vector<8x32xf32>, vector<1x8xf32> -> vector<1x8xf32>
    %c0_4 = arith.constant 0 : index
    %c0_5 = arith.constant 0 : index
    %4 = vector.load %arg4[%c0_4, %c0_5] : memref<8x32xf32, #tpu.memory_space<vmem>>, vector<8x32xf32>
    %cst_6 = arith.constant dense<0.000000e+00> : vector<1x8xf32>
    %5 = tpu.matmul %0, %4, %cst_6 {dimension_numbers = #tpu.dot_dimension_numbers<[1], [1], [0], [0], [0, 0, 1, 0], [], []>} : vector<1x32xf32>, vector<8x32xf32>, vector<1x8xf32> -> vector<1x8xf32>
    %6 = tpu.concatenate %3, %5 in 0 : vector<1x8xf32>, vector<1x8xf32> -> vector<2x8xf32>
    %7 = vector.broadcast %1 : f32 to vector<2x8xf32>
    %8 = arith.addf %6, %7 : vector<2x8xf32>
    %c0_7 = arith.constant 0 : index
    %c0_8 = arith.constant 0 : index
    %9 = vector.load %arg5[%c0_7, %c0_8] : memref<2x8xf32, #tpu.memory_space<vmem>>, vector<2x8xf32>
    tpu.vector_store %arg5[%c0_7, %c0_8], %8 {strides = array<i32>} : memref<2x8xf32, #tpu.memory_space<vmem>>, vector<2x8xf32>,
    return
  }
  func.func @transform_0(%arg0: i32) -> (i32, i32) {
    %c0_i32 = arith.constant 0 : i32
    %c0_i32_0 = arith.constant 0 : i32
    %c0_i32_1 = arith.constant 0 : i32
    return %c0_i32, %c0_i32_0 : i32, i32
  }
  func.func @transform_1(%arg0: i32) -> i32 {
    %c0_i32 = arith.constant 0 : i32
    %c0_i32_0 = arith.constant 0 : i32
    return %c0_i32 : i32
  }
  func.func @transform_2(%arg0: i32) -> (i32, i32) {
    %c0_i32 = arith.constant 0 : i32
    %c0_i32_0 = arith.constant 0 : i32
    return %arg0, %c0_i32 : i32, i32
  }
  func.func @transform_3(%arg0: i32) -> (i32, i32) {
    %c0_i32 = arith.constant 0 : i32
    %c0_i32_0 = arith.constant 0 : i32
    return %arg0, %c0_i32 : i32, i32
  }
  func.func @transform_4(%arg0: i32) -> (i32, i32) {
    %c0_i32 = arith.constant 0 : i32
    %c0_i32_0 = arith.constant 0 : i32
    return %c0_i32, %arg0 : i32, i32
  }
}

</mosaic_0001>

<llo_original>
// kernel: tpu_custom_call.1
$region0: #{tpu_custom_call.1}
  #allocation0 [shape = 'u32[]', space=smem, size = 0x4, offset = 0x4, fixed_abs, tag = 'smem constant byte address 0x4 - core index']
  #allocation1 [shape = 'u32[72,128]{1,0:T(1,128)}', space=vmem, size = 0x9000, scoped, tag = 'internal scratch']
  #allocation2 [shape = 'f32[1]{0:T(128)S(6)}', space=smem, size = 0x200, scoped, tag = 'scoped memory for tpu_custom_call.1']
  %s0 = inlined_call_operand.vmem [shape: f32[1,32], index: 0, kind: input, shape index: {}]
  %s1 = inlined_call_operand.<no memory space> [shape: f32[1], index: 1, kind: input, shape index: {}]
  %s2 = inlined_call_operand.hbm [shape: f32[8,32], index: 2, kind: input, shape index: {}]
  %s3 = inlined_call_operand.hbm [shape: f32[8,32], index: 3, kind: input, shape index: {}]
  %s4 = inlined_call_operand.hbm [shape: f32[2,8], index: 4, kind: output, shape index: {}]
  %s5 = sld [smem:[#allocation0]]
  $region34: #{tpu_custom_call.1} parent=0
    _
  %s7 = ssub.s32 1, %s5
  %s8 = scalar_select 0, %s7, %s5
  %9 = sst [smem:[#allocation2]] %s1
  $region1: #{tpu_custom_call.1} parent=0
    #allocation3 [shape = 'u8[4096]{0}', space=vmem, size = 0x1000, scoped, tag = 'input window, operand 2, single buffered']
    #allocation4 [shape = 's32[1]{0}', space=sflag, size = 0x4, scoped, tag = 'scoped memory for tpu_custom_call.1']
    #allocation5 [shape = 's32[1]{0}', space=sflag, size = 0x4, scoped, tag = 'scoped memory for tpu_custom_call.1']
    #allocation6 [shape = 'u8[4096]{0}', space=vmem, size = 0x1000, scoped, tag = 'input window, operand 3, single buffered']
    #allocation7 [shape = 's32[1]{0}', space=sflag, size = 0x4, scoped, tag = 'scoped memory for tpu_custom_call.1']
    #allocation8 [shape = 'u8[1024]{0}', space=vmem, size = 0x400, scoped, tag = 'output window, operand 0, single buffered']
    %10 = vsyncpa [#allocation4], 0
    %11 = vsyncpa [#allocation7], 0
    %12 = vsyncpa [#allocation5], 0
    // Predicated region
    $region2: #{tpu_custom_call.1} parent=1 // pred_check
      _
    $region3: #{tpu_custom_call.1} parent=1 // pred_check_branch
      %14 = sbr.rel (0) target = $region5
    $region4: #{tpu_custom_call.1} parent=1 // pred_region
      _
    $region5: #{tpu_custom_call.1} parent=1 // pred_fallthru
      _
    // Predicated region
    $region6: #{tpu_custom_call.1} parent=1 // pred_check
      _
    $region7: #{tpu_custom_call.1} parent=1 // pred_check_branch
      %16 = sbr.rel (0) target = $region9
    $region8: #{tpu_custom_call.1} parent=1 // pred_region
      _
    $region9: #{tpu_custom_call.1} parent=1 // pred_fallthru
      _
    // Predicated region
    $region10: #{tpu_custom_call.1} parent=1 // pred_check
      _
    $region11: #{tpu_custom_call.1} parent=1 // pred_check_branch
      %18 = sbr.rel (0) target = $region13
    $region12: #{tpu_custom_call.1} parent=1 // pred_region
      %20 = vsyncadd [#allocation4], 0
      %s22 = sshll.u32 %s2, 4
      %s23 = int_to_ptr.hbm [resolvable:$true] %s22
      %s24 = sshll.u32 [#allocation3], 4
      %s25 = int_to_ptr.vmem [resolvable:$true] %s24
      %27 = dma.hbm_to_vmem [thread:$0]  %s23, 128, %s25, [#allocation4]
    $region13: #{tpu_custom_call.1} parent=1 // pred_fallthru
      _
    // Predicated region
    $region14: #{tpu_custom_call.1} parent=1 // pred_check
      _
    $region15: #{tpu_custom_call.1} parent=1 // pred_check_branch
      %29 = sbr.rel (0) target = $region17
    $region16: #{tpu_custom_call.1} parent=1 // pred_region
      %31 = vsyncadd [#allocation7], 0
      %s33 = sshll.u32 %s3, 4
      %s34 = int_to_ptr.hbm [resolvable:$true] %s33
      %s35 = sshll.u32 [#allocation6], 4
      %s36 = int_to_ptr.vmem [resolvable:$true] %s35
      %38 = dma.hbm_to_vmem [thread:$0]  %s34, 128, %s36, [#allocation7]
    $region17: #{tpu_custom_call.1} parent=1 // pred_fallthru
      _
    // Predicated region
    $region18: #{tpu_custom_call.1} parent=1 // pred_check
      _
    $region19: #{tpu_custom_call.1} parent=1 // pred_check_branch
      %40 = sbr.rel (0) target = $region21
    $region20: #{tpu_custom_call.1} parent=1 // pred_region
      %42 = dma.done [#allocation4], 128
    $region21: #{tpu_custom_call.1} parent=1 // pred_fallthru
      _
    // Predicated region
    $region22: #{tpu_custom_call.1} parent=1 // pred_check
      _
    $region23: #{tpu_custom_call.1} parent=1 // pred_check_branch
      %44 = sbr.rel (0) target = $region25
    $region24: #{tpu_custom_call.1} parent=1 // pred_region
      %46 = dma.done [#allocation7], 128
    $region25: #{tpu_custom_call.1} parent=1 // pred_fallthru
      _
    %v47 = vld [vmem:[%s0] sm:$0x1]
    %s48 = sld [smem:[#allocation2]]
    %v49 = vld [vmem:[#allocation3] sm:$0xff]
    %vm50 = vcmask 261120
    %v52 = vsel %vm50, %v47, 0
    %v55 = vsel %vm50, %v49, 0
    %57 = vmatpush.xpose.msra.mxu0 0.0
    %58 = vmatpush.xpose.msra.mxu0 0.0
    %59 = vmatpush.xpose.msra.mxu0 0.0
    %60 = vmatpush.xpose.msra.mxu0 0.0
    %61 = vmatpush.xpose.msra.mxu0 0.0
    %62 = vmatpush.xpose.msra.mxu0 0.0
    %63 = vmatpush.xpose.msra.mxu0 0.0
    %64 = vmatpush.xpose.msra.mxu0 0.0
    %65 = vmatpush.xpose.msra.mxu0 0.0
    %66 = vmatpush.xpose.msra.mxu0 0.0
    %67 = vmatpush.xpose.msra.mxu0 0.0
    %68 = vmatpush.xpose.msra.mxu0 0.0
    %69 = vmatpush.xpose.msra.mxu0 0.0
    %70 = vmatpush.xpose.msra.mxu0 0.0
    %71 = vmatpush.xpose.msra.mxu0 0.0
    %72 = vmatpush.xpose.msra.mxu0 %v55
    %73 = vmatmul.f32.gmra.mxu0 %v52
    %v74 = vpop.f32.mrf.mxu0
    %v75 = vadd.f32 0.0, %v74
    %76 = vdwg.mxu0
    %v77 = vld [vmem:[#allocation6] sm:$0xff]
    %v79 = vsel %vm50, %v77, 0
    %81 = vmatpush.xpose.msra.mxu0 0.0
    %82 = vmatpush.xpose.msra.mxu0 0.0
    %83 = vmatpush.xpose.msra.mxu0 0.0
    %84 = vmatpush.xpose.msra.mxu0 0.0
    %85 = vmatpush.xpose.msra.mxu0 0.0
    %86 = vmatpush.xpose.msra.mxu0 0.0
    %87 = vmatpush.xpose.msra.mxu0 0.0
    %88 = vmatpush.xpose.msra.mxu0 0.0
    %89 = vmatpush.xpose.msra.mxu0 0.0
    %90 = vmatpush.xpose.msra.mxu0 0.0
    %91 = vmatpush.xpose.msra.mxu0 0.0
    %92 = vmatpush.xpose.msra.mxu0 0.0
    %93 = vmatpush.xpose.msra.mxu0 0.0
    %94 = vmatpush.xpose.msra.mxu0 0.0
    %95 = vmatpush.xpose.msra.mxu0 0.0
    %96 = vmatpush.xpose.msra.mxu0 %v79
    %97 = vmatmul.f32.gmra.mxu0 %v52
    %v98 = vpop.f32.mrf.mxu0
    %v99 = vadd.f32 0.0, %v98
    %100 = vdwg.mxu0
    %v102 = vrot.slane %v99, 7
    %vm104 = vcmask 1040384
    %v105 = vsel %vm104, %v75, %v102
    %v106 = vstv %s48
    %v107 = vadd.f32 %v105, %v106
    %vm108 = vcmask 58368
    %109 = vst.msk [vmem:[#allocation8] sm:$0x3] %vm108, %v107
    // Predicated region
    $region26: #{tpu_custom_call.1} parent=1 // pred_check
      _
    $region27: #{tpu_custom_call.1} parent=1 // pred_check_branch
      %111 = sbr.rel (0) target = $region29
    $region28: #{tpu_custom_call.1} parent=1 // pred_region
      %113 = vsyncadd [#allocation5], 0
      %s115 = sshll.u32 [#allocation8], 4
      %s116 = int_to_ptr.vmem [resolvable:$true] %s115
      %s117 = sshll.u32 %s4, 4
      %s118 = int_to_ptr.hbm [resolvable:$true] %s117
      %120 = dma.vmem_to_hbm [thread:$0]  %s116, 32, %s118, [#allocation5]
    $region29: #{tpu_custom_call.1} parent=1 // pred_fallthru
      _
    // Predicated region
    $region30: #{tpu_custom_call.1} parent=1 // pred_check
      _
    $region31: #{tpu_custom_call.1} parent=1 // pred_check_branch
      %122 = sbr.rel (0) target = $region33
    $region32: #{tpu_custom_call.1} parent=1 // pred_region
      %124 = dma.done [#allocation5], 32
    $region33: #{tpu_custom_call.1} parent=1 // pred_fallthru
      _
    %125 = vsyncpa [#allocation4], 1
    %126 = vsyncpa [#allocation7], 1
    %127 = vsyncpa [#allocation5], 1

</llo_original>
